<compile_context>
chip_gen: v7x
topology: tpu7x:2x2x1
jax: 0.10.0
libtpu: 0.0.40
codegen_flags: <defaults>
</compile_context>

<pallas_src>
import functools

import jax
import jax.numpy as jnp
from jax.experimental import pallas as pl
from jax.experimental.pallas import tpu as pltpu


def _actor_kernel(x_ref,
                  wkvq_ref, bkvq_ref,
                  w1_ref, b1_ref,
                  w2_ref, b2_ref,
                  wa_ref, ba_ref,
                  out_ref,
                  *, max_action):
    Bt, S, D = x_ref.shape
    cdt = wkvq_ref.dtype                                   # matmul operand dtype

    # ---- single fused projection [K | V | Q*1/sqrt(D)] over all Bt*S rows ----
    x2d = x_ref[...].reshape(Bt * S, D).astype(cdt)
    kvq = jnp.dot(x2d, wkvq_ref[...],
                  preferred_element_type=jnp.float32) + bkvq_ref[...]   # (Bt*S, 3D) f32
    kvq3 = kvq.reshape(Bt, S, 3 * D)                       # leading-dim split: no relayout

    # Query for the last timestep only (the only row the module keeps);
    # the 1/sqrt(D) attention scale is already folded into the weights.
    q = kvq3[:, S - 1, 2 * D:]                             # (Bt, D)

    # ---- attention for the last timestep (packed math; only small slices) ----
    scores = jnp.sum(q[:, None, :] * kvq3[:, :, :D], axis=-1)          # (Bt, S)
    m = jnp.max(scores, axis=-1, keepdims=True)
    e = jnp.exp(scores - m)
    attn = e * pl.reciprocal(jnp.sum(e, axis=-1, keepdims=True), approx=False)
    # Reduce the packed tensor; extra [attn@K | attn@Q] lanes ride along for
    # free (same vregs, 3D=96 < 128 lanes) and are discarded by the tiny slice.
    att_packed = jnp.sum(attn[:, :, None] * kvq3, axis=1)              # (Bt, 3D)
    att = att_packed[:, D:2 * D]                                       # (Bt, D) = attn @ V

    # ---- MLP head, one row per batch element ----
    h1 = jnp.maximum(
        jnp.dot(att.astype(cdt), w1_ref[...],
                preferred_element_type=jnp.float32) + b1_ref[...], 0.0)
    h2 = jnp.maximum(
        jnp.dot(h1.astype(cdt), w2_ref[...],
                preferred_element_type=jnp.float32) + b2_ref[...], 0.0)
    acts = max_action * jnp.tanh(
        jnp.dot(h2.astype(cdt), wa_ref[...],
                preferred_element_type=jnp.float32) + ba_ref[...])

    out_ref[...] = acts.astype(out_ref.dtype)              # (Bt, A_pad) lane-dense store


def prepare_params(params, compute_dtype=jnp.float32):
    """One-time parameter preparation (hoisted out of the forward path)."""
    D = params["wq"].shape[0]
    H = params["w2"].shape[1]
    A = params["wa"].shape[1]
    A_pad = 128 * pl.cdiv(A, 128)
    scale = 1.0 / float(D) ** 0.5
    # Fused [K | V | Q] projection; 1/sqrt(D) folded into the query columns.
    wkvq = jnp.concatenate([params["wk"], params["wv"], params["wq"] * scale], axis=1)
    bkvq = jnp.concatenate([params["bk"], params["bv"], params["bq"] * scale], axis=1)
    # Action head padded to a lane-dense 128-wide output (sliced off outside).
    wa = jnp.pad(params["wa"], ((0, 0), (0, A_pad - A)))
    ba = jnp.pad(params["ba"], ((0, 0), (0, A_pad - A)))
    cd = compute_dtype
    return dict(
        wkvq=wkvq.astype(cd), bkvq=bkvq.astype(jnp.float32),
        w1=params["w1"].astype(cd), b1=params["b1"].astype(jnp.float32),
        w2=params["w2"].astype(cd), b2=params["b2"].astype(jnp.float32),
        wa=wa.astype(cd), ba=ba.astype(jnp.float32),
        obs_dim=D, hidden=H, act_dim=A, act_pad=A_pad,
    )


def _pick_batch_tile(B, S):
    """Batch tile & grid size.

    Targets ~4K projected rows per grid step (amortize the ~0.35 us fixed
    per-step overhead), keeps >= 2 (even) grid steps when the batch allows
    (dual-TC v7x / megacore), keeps the tile a multiple of 8 (sublane layout)
    and picks it near ceil(B / nblk) to minimize wasted padded rows.
    """
    if B <= 8:
        return B, 1
    bt_cap = max(8, min(512, 4096 // max(S, 1)))
    nblk = max(2, pl.cdiv(B, bt_cap))
    if nblk % 2:
        nblk += 1                                   # balanced split across 2 TCs
    Bt = 8 * pl.cdiv(pl.cdiv(B, nblk), 8)
    nblk = pl.cdiv(B, Bt)
    return Bt, nblk


def actor_forward(x, prep, max_action):
    """x: (B, S, D) float32.  prep: output of prepare_params.  Returns (B, A)."""
    B, S, D = x.shape
    assert D == prep["obs_dim"]
    H, A, A_pad = prep["hidden"], prep["act_dim"], prep["act_pad"]

    Bt, nblk = _pick_batch_tile(B, S)
    Bp = nblk * Bt
    if Bp != B:
        x = jnp.pad(x, ((0, Bp - B), (0, 0), (0, 0)))

    kernel = functools.partial(_actor_kernel, max_action=float(max_action))

    def wspec(shape):
        return pl.BlockSpec(shape, lambda b: (0, 0))

    grid_spec = pltpu.PrefetchScalarGridSpec(
        num_scalar_prefetch=0,
        grid=(nblk,),
        in_specs=[
            pl.BlockSpec((Bt, S, D), lambda b: (b, 0, 0)),   # x
            wspec((D, 3 * D)), wspec((1, 3 * D)),            # fused K/V/Q (pre-scaled)
            wspec((D, D)), wspec((1, D)),                    # fc1
            wspec((D, H)), wspec((1, H)),                    # fc2
            wspec((H, A_pad)), wspec((1, A_pad)),            # action_out (padded)
        ],
        out_specs=pl.BlockSpec((Bt, A_pad), lambda b: (b, 0)),
    )

    wbytes = sum(int(prep[k].size) * prep[k].dtype.itemsize
                 for k in ("wkvq", "bkvq", "w1", "b1", "w2", "b2", "wa", "ba"))
    flops = (2 * Bp * S * D * 3 * D        # fused K/V/Q projection
             + 2 * Bp * S * D              # last-row attention scores
             + 2 * Bp * S * 3 * D          # packed weighted-value reduction
             + 2 * Bp * D * D              # fc1
             + 2 * Bp * D * H              # fc2
             + 2 * Bp * H * A_pad)         # action head
    cost = pl.CostEstimate(
        flops=flops,
        transcendentals=Bp * (S + 1 + A),  # exp + reciprocal + tanh (useful lanes)
        bytes_accessed=(x.dtype.itemsize * Bp * S * D
                        + 4 * Bp * A_pad
                        + nblk * wbytes))

    out = pl.pallas_call(
        kernel,
        out_shape=jax.ShapeDtypeStruct((Bp, A_pad), jnp.float32),
        grid_spec=grid_spec,
        compiler_params=pltpu.CompilerParams(
            dimension_semantics=("parallel",),
            vmem_limit_bytes=48 * 1024 * 1024),
        cost_estimate=cost,
    )(x, prep["wkvq"], prep["bkvq"], prep["w1"], prep["b1"],
      prep["w2"], prep["b2"], prep["wa"], prep["ba"])

    return out[:B, :A]


def init_params(key, obs_dim, act_dim, hidden=64):
    """Deterministic synthetic parameters.  Linear weights stored (in, out)."""
    keys = jax.random.split(key, 12)

    def lin(kw, kb, n_in, n_out):
        bound = 1.0 / jnp.sqrt(jnp.float32(n_in))
        w = jax.random.uniform(kw, (n_in, n_out), jnp.float32, -bound, bound)
        b = jax.random.uniform(kb, (1, n_out), jnp.float32, -bound, bound)
        return w, b

    wq, bq = lin(keys[0], keys[1], obs_dim, obs_dim)
    wk, bk = lin(keys[2], keys[3], obs_dim, obs_dim)
    wv, bv = lin(keys[4], keys[5], obs_dim, obs_dim)
    w1, b1 = lin(keys[6], keys[7], obs_dim, obs_dim)
    w2, b2 = lin(keys[8], keys[9], obs_dim, hidden)
    wa, ba = lin(keys[10], keys[11], hidden, act_dim)
    return dict(wq=wq, bq=bq, wk=wk, bk=bk, wv=wv, bv=bv,
                w1=w1, b1=b1, w2=w2, b2=b2, wa=wa, ba=ba)


def actor_reference(x, params, max_action):
    """Pure-JAX reference mirroring the PyTorch module exactly."""
    q = x @ params["wq"] + params["bq"]
    k = x @ params["wk"] + params["bk"]
    v = x @ params["wv"] + params["bv"]
    scores = jnp.einsum("bqd,bkd->bqk", q, k) / jnp.sqrt(jnp.float32(x.shape[-1]))
    attn = jax.nn.softmax(scores, axis=-1)
    att = jnp.einsum("bqk,bkd->bqd", attn, v)
    h1 = jax.nn.relu(att @ params["w1"] + params["b1"])
    h2 = jax.nn.relu(h1 @ params["w2"] + params["b2"])
    acts = max_action * jnp.tanh(h2 @ params["wa"] + params["ba"])
    return acts[:, -1, :]


if __name__ == "__main__":
    MAX_ACTION = 2.0
    B, S, OBS, ACT = 2, 8, 32, 4

    key = jax.random.PRNGKey(0)
    kx, kp, kx2, kx3 = jax.random.split(key, 4)
    params = init_params(kp, OBS, ACT)
    prep = prepare_params(params)                    # one-time weight prep (f32)

    # Small test (single grid step: Bt == B == 2).
    x = jax.random.normal(kx, (B, S, OBS), jnp.float32)
    out = jax.block_until_ready(actor_forward(x, prep, MAX_ACTION))
    ref = actor_reference(x, params, MAX_ACTION)
    assert out.shape == (B, ACT)
    assert jnp.allclose(out, ref, atol=1e-5, rtol=1e-5), (out, ref)

    # Batch exercising the tiled + minimally padded path (Bt=24, 2 grid steps).
    B2 = 40
    x2 = jax.random.normal(kx2, (B2, S, OBS), jnp.float32)
    out2 = jax.block_until_ready(actor_forward(x2, prep, MAX_ACTION))
    ref2 = actor_reference(x2, params, MAX_ACTION)
    assert out2.shape == (B2, ACT)
    assert jnp.allclose(out2, ref2, atol=1e-5, rtol=1e-5), (out2, ref2)

    # Larger batch exercising the large-tile path (Bt=304, 2 grid steps).
    B3 = 600
    x3 = jax.random.normal(kx3, (B3, S, OBS), jnp.float32)
    out3 = jax.block_until_ready(actor_forward(x3, prep, MAX_ACTION))
    ref3 = actor_reference(x3, params, MAX_ACTION)
    assert out3.shape == (B3, ACT)
    assert jnp.allclose(out3, ref3, atol=1e-5, rtol=1e-5)

    # Optional bf16 matmul-operand path (softmax/tanh stay f32); loose parity.
    prep_bf16 = prepare_params(params, compute_dtype=jnp.bfloat16)
    out_bf16 = jax.block_until_ready(actor_forward(x2, prep_bf16, MAX_ACTION))
    assert out_bf16.shape == (B2, ACT)
    assert jnp.allclose(out_bf16, ref2, atol=1e-1, rtol=1e-1)

    print("KERNEL_OK")
</pallas_src>

<mosaic_0001>
module attributes {stable_mosaic.version = 11 : i64} {
  func.func @_actor_kernel(%arg0: i32, %arg1: memref<2x8x32xf32, #tpu.memory_space<vmem>>, %arg2: memref<32x96xf32, #tpu.memory_space<vmem>>, %arg3: memref<1x96xf32, #tpu.memory_space<vmem>>, %arg4: memref<32x32xf32, #tpu.memory_space<vmem>>, %arg5: memref<1x32xf32, #tpu.memory_space<vmem>>, %arg6: memref<32x64xf32, #tpu.memory_space<vmem>>, %arg7: memref<1x64xf32, #tpu.memory_space<vmem>>, %arg8: memref<64x128xf32, #tpu.memory_space<vmem>>, %arg9: memref<1x128xf32, #tpu.memory_space<vmem>>, %arg10: memref<2x128xf32, #tpu.memory_space<vmem>>) attributes {dimension_semantics = [#tpu.dimension_semantics<parallel>], iteration_bounds = array<i64: 1>, scalar_prefetch = 0 : i64, scratch_operands = 0 : i64, tpu.core_type = #tpu.core_type<tc>, window_params = [{transform_indices = @transform_0, window_bounds = array<i64: 2, 8, 32>}, {pipeline_mode = #tpu.pipeline_mode<synchronous>, transform_indices = @transform_1, window_bounds = array<i64: 32, 96>}, {pipeline_mode = #tpu.pipeline_mode<synchronous>, transform_indices = @transform_2, window_bounds = array<i64: 1, 96>}, {pipeline_mode = #tpu.pipeline_mode<synchronous>, transform_indices = @transform_3, window_bounds = array<i64: 32, 32>}, {pipeline_mode = #tpu.pipeline_mode<synchronous>, transform_indices = @transform_4, window_bounds = array<i64: 1, 32>}, {pipeline_mode = #tpu.pipeline_mode<synchronous>, transform_indices = @transform_5, window_bounds = array<i64: 32, 64>}, {pipeline_mode = #tpu.pipeline_mode<synchronous>, transform_indices = @transform_6, window_bounds = array<i64: 1, 64>}, {pipeline_mode = #tpu.pipeline_mode<synchronous>, transform_indices = @transform_7, window_bounds = array<i64: 64, 128>}, {pipeline_mode = #tpu.pipeline_mode<synchronous>, transform_indices = @transform_8, window_bounds = array<i64: 1, 128>}, {transform_indices = @transform_9, window_bounds = array<i64: 2, 128>}]} {
    %c0 = arith.constant 0 : index
    %c0_0 = arith.constant 0 : index
    %c0_1 = arith.constant 0 : index
    %0 = vector.load %arg1[%c0, %c0_0, %c0_1] : memref<2x8x32xf32, #tpu.memory_space<vmem>>, vector<2x8x32xf32>
    %1 = vector.shape_cast %0 : vector<2x8x32xf32> to vector<16x32xf32>
    %c0_2 = arith.constant 0 : index
    %c0_3 = arith.constant 0 : index
    %2 = vector.load %arg2[%c0_2, %c0_3] : memref<32x96xf32, #tpu.memory_space<vmem>>, vector<32x96xf32>
    %cst = arith.constant dense<0.000000e+00> : vector<16x96xf32>
    %3 = tpu.matmul %1, %2, %cst {dimension_numbers = #tpu.dot_dimension_numbers<[1], [0], [0], [1], [0, 0, 1, 1], [], []>} : vector<16x32xf32>, vector<32x96xf32>, vector<16x96xf32> -> vector<16x96xf32>
    %c0_4 = arith.constant 0 : index
    %c0_5 = arith.constant 0 : index
    %4 = vector.load %arg3[%c0_4, %c0_5] : memref<1x96xf32, #tpu.memory_space<vmem>>, vector<1x96xf32>
    %5 = vector.broadcast %4 : vector<1x96xf32> to vector<16x96xf32>
    %6 = arith.addf %3, %5 : vector<16x96xf32>
    %7 = vector.shape_cast %6 : vector<16x96xf32> to vector<2x8x96xf32>
    %8 = vector.extract_strided_slice %7 {offsets = [0, 7, 64], sizes = [2, 1, 32], strides = [1, 1, 1]} : vector<2x8x96xf32> to vector<2x1x32xf32>
    %9 = vector.shape_cast %8 : vector<2x1x32xf32> to vector<2x32xf32>
    %10 = vector.shape_cast %9 : vector<2x32xf32> to vector<2x1x32xf32>
    %11 = vector.extract_strided_slice %7 {offsets = [0, 0, 0], sizes = [2, 8, 32], strides = [1, 1, 1]} : vector<2x8x96xf32> to vector<2x8x32xf32>
    %12 = vector.broadcast %10 : vector<2x1x32xf32> to vector<2x8x32xf32>
    %13 = arith.mulf %12, %11 : vector<2x8x32xf32>
    %cst_6 = arith.constant dense<0.000000e+00> : vector<2x8xf32>
    %14 = vector.multi_reduction <add>, %13, %cst_6 [2] : vector<2x8x32xf32> to vector<2x8xf32>
    %cst_7 = arith.constant dense<0xFF800000> : vector<2xf32>
    %15 = vector.multi_reduction <maximumf>, %14, %cst_7 [1] : vector<2x8xf32> to vector<2xf32>
    %16 = vector.shape_cast %15 : vector<2xf32> to vector<2x1xf32>
    %17 = vector.broadcast %16 : vector<2x1xf32> to vector<2x8xf32>
    %18 = arith.subf %14, %17 : vector<2x8xf32>
    %19 = math.exp %18 : vector<2x8xf32>
    %cst_8 = arith.constant dense<0.000000e+00> : vector<2xf32>
    %20 = vector.multi_reduction <add>, %19, %cst_8 [1] : vector<2x8xf32> to vector<2xf32>
    %21 = vector.shape_cast %20 : vector<2xf32> to vector<2x1xf32>
    %22 = tpu.reciprocal %21 : vector<2x1xf32> -> vector<2x1xf32>
    %23 = vector.broadcast %22 : vector<2x1xf32> to vector<2x8xf32>
    %24 = arith.mulf %19, %23 : vector<2x8xf32>
    %25 = vector.shape_cast %24 : vector<2x8xf32> to vector<2x8x1xf32>
    %26 = vector.broadcast %25 : vector<2x8x1xf32> to vector<2x8x96xf32>
    %27 = arith.mulf %26, %7 : vector<2x8x96xf32>
    %cst_9 = arith.constant dense<0.000000e+00> : vector<2x96xf32>
    %28 = vector.multi_reduction <add>, %27, %cst_9 [1] : vector<2x8x96xf32> to vector<2x96xf32>
    %29 = vector.extract_strided_slice %28 {offsets = [0, 32], sizes = [2, 32], strides = [1, 1]} : vector<2x96xf32> to vector<2x32xf32>
    %c0_10 = arith.constant 0 : index
    %c0_11 = arith.constant 0 : index
    %30 = vector.load %arg4[%c0_10, %c0_11] : memref<32x32xf32, #tpu.memory_space<vmem>>, vector<32x32xf32>
    %cst_12 = arith.constant dense<0.000000e+00> : vector<2x32xf32>
    %31 = tpu.matmul %29, %30, %cst_12 {dimension_numbers = #tpu.dot_dimension_numbers<[1], [0], [0], [1], [0, 0, 1, 1], [], []>} : vector<2x32xf32>, vector<32x32xf32>, vector<2x32xf32> -> vector<2x32xf32>
    %c0_13 = arith.constant 0 : index
    %c0_14 = arith.constant 0 : index
    %32 = vector.load %arg5[%c0_13, %c0_14] : memref<1x32xf32, #tpu.memory_space<vmem>>, vector<1x32xf32>
    %33 = vector.broadcast %32 : vector<1x32xf32> to vector<2x32xf32>
    %34 = arith.addf %31, %33 : vector<2x32xf32>
    %cst_15 = arith.constant 0.000000e+00 : f32
    %35 = vector.broadcast %cst_15 : f32 to vector<2x32xf32>
    %36 = arith.maximumf %34, %35 : vector<2x32xf32>
    %c0_16 = arith.constant 0 : index
    %c0_17 = arith.constant 0 : index
    %37 = vector.load %arg6[%c0_16, %c0_17] : memref<32x64xf32, #tpu.memory_space<vmem>>, vector<32x64xf32>
    %cst_18 = arith.constant dense<0.000000e+00> : vector<2x64xf32>
    %38 = tpu.matmul %36, %37, %cst_18 {dimension_numbers = #tpu.dot_dimension_numbers<[1], [0], [0], [1], [0, 0, 1, 1], [], []>} : vector<2x32xf32>, vector<32x64xf32>, vector<2x64xf32> -> vector<2x64xf32>
    %c0_19 = arith.constant 0 : index
    %c0_20 = arith.constant 0 : index
    %39 = vector.load %arg7[%c0_19, %c0_20] : memref<1x64xf32, #tpu.memory_space<vmem>>, vector<1x64xf32>
    %40 = vector.broadcast %39 : vector<1x64xf32> to vector<2x64xf32>
    %41 = arith.addf %38, %40 : vector<2x64xf32>
    %cst_21 = arith.constant 0.000000e+00 : f32
    %42 = vector.broadcast %cst_21 : f32 to vector<2x64xf32>
    %43 = arith.maximumf %41, %42 : vector<2x64xf32>
    %c0_22 = arith.constant 0 : index
    %c0_23 = arith.constant 0 : index
    %44 = vector.load %arg8[%c0_22, %c0_23] : memref<64x128xf32, #tpu.memory_space<vmem>>, vector<64x128xf32>
    %cst_24 = arith.constant dense<0.000000e+00> : vector<2x128xf32>
    %45 = tpu.matmul %43, %44, %cst_24 {dimension_numbers = #tpu.dot_dimension_numbers<[1], [0], [0], [1], [0, 0, 1, 1], [], []>} : vector<2x64xf32>, vector<64x128xf32>, vector<2x128xf32> -> vector<2x128xf32>
    %c0_25 = arith.constant 0 : index
    %c0_26 = arith.constant 0 : index
    %46 = vector.load %arg9[%c0_25, %c0_26] : memref<1x128xf32, #tpu.memory_space<vmem>>, vector<1x128xf32>
    %47 = vector.broadcast %46 : vector<1x128xf32> to vector<2x128xf32>
    %48 = arith.addf %45, %47 : vector<2x128xf32>
    %49 = math.tanh %48 : vector<2x128xf32>
    %cst_27 = arith.constant 2.000000e+00 : f32
    %50 = vector.broadcast %cst_27 : f32 to vector<2x128xf32>
    %51 = arith.mulf %50, %49 : vector<2x128xf32>
    %c0_28 = arith.constant 0 : index
    %c0_29 = arith.constant 0 : index
    %52 = vector.load %arg10[%c0_28, %c0_29] : memref<2x128xf32, #tpu.memory_space<vmem>>, vector<2x128xf32>
    tpu.vector_store %arg10[%c0_28, %c0_29], %51 {strides = array<i32>} : memref<2x128xf32, #tpu.memory_space<vmem>>, vector<2x128xf32>,
    return
  }
  func.func @transform_0(%arg0: i32) -> (i32, i32, i32) {
    %c0_i32 = arith.constant 0 : i32
    %c0_i32_0 = arith.constant 0 : i32
    %c0_i32_1 = arith.constant 0 : i32
    return %arg0, %c0_i32, %c0_i32_0 : i32, i32, i32
  }
  func.func @transform_1(%arg0: i32) -> (i32, i32) {
    %c0_i32 = arith.constant 0 : i32
    %c0_i32_0 = arith.constant 0 : i32
    %c0_i32_1 = arith.constant 0 : i32
    return %c0_i32, %c0_i32_0 : i32, i32
  }
  func.func @transform_2(%arg0: i32) -> (i32, i32) {
    %c0_i32 = arith.constant 0 : i32
    %c0_i32_0 = arith.constant 0 : i32
    %c0_i32_1 = arith.constant 0 : i32
    return %c0_i32, %c0_i32_0 : i32, i32
  }
  func.func @transform_3(%arg0: i32) -> (i32, i32) {
    %c0_i32 = arith.constant 0 : i32
    %c0_i32_0 = arith.constant 0 : i32
    %c0_i32_1 = arith.constant 0 : i32
    return %c0_i32, %c0_i32_0 : i32, i32
  }
  func.func @transform_4(%arg0: i32) -> (i32, i32) {
    %c0_i32 = arith.constant 0 : i32
    %c0_i32_0 = arith.constant 0 : i32
    %c0_i32_1 = arith.constant 0 : i32
    return %c0_i32, %c0_i32_0 : i32, i32
  }
  func.func @transform_5(%arg0: i32) -> (i32, i32) {
    %c0_i32 = arith.constant 0 : i32
    %c0_i32_0 = arith.constant 0 : i32
    %c0_i32_1 = arith.constant 0 : i32
    return %c0_i32, %c0_i32_0 : i32, i32
  }
  func.func @transform_6(%arg0: i32) -> (i32, i32) {
    %c0_i32 = arith.constant 0 : i32
    %c0_i32_0 = arith.constant 0 : i32
    %c0_i32_1 = arith.constant 0 : i32
    return %c0_i32, %c0_i32_0 : i32, i32
  }
  func.func @transform_7(%arg0: i32) -> (i32, i32) {
    %c0_i32 = arith.constant 0 : i32
    %c0_i32_0 = arith.constant 0 : i32
    %c0_i32_1 = arith.constant 0 : i32
    return %c0_i32, %c0_i32_0 : i32, i32
  }
  func.func @transform_8(%arg0: i32) -> (i32, i32) {
    %c0_i32 = arith.constant 0 : i32
    %c0_i32_0 = arith.constant 0 : i32
    %c0_i32_1 = arith.constant 0 : i32
    return %c0_i32, %c0_i32_0 : i32, i32
  }
  func.func @transform_9(%arg0: i32) -> (i32, i32) {
    %c0_i32 = arith.constant 0 : i32
    %c0_i32_0 = arith.constant 0 : i32
    return %arg0, %c0_i32 : i32, i32
  }
}

</mosaic_0001>

<llo_original>
// kernel: tpu_custom_call.1
$region0: #{tpu_custom_call.1}
  #allocation0 [shape = 'u32[]', space=smem, size = 0x4, offset = 0x4, fixed_abs, tag = 'smem constant byte address 0x4 - core index']
  #allocation1 [shape = 'u32[144,128]{1,0:T(1,128)}', space=vmem, size = 0x12000, scoped, tag = 'internal scratch']
  %s0 = inlined_call_operand.hbm [shape: f32[2,8,32], index: 0, kind: input, shape index: {}]
  %s1 = inlined_call_operand.hbm [shape: f32[32,96], index: 1, kind: input, shape index: {}]
  %s2 = inlined_call_operand.vmem [shape: f32[1,96], index: 2, kind: input, shape index: {}]
  %s3 = inlined_call_operand.hbm [shape: f32[32,32], index: 3, kind: input, shape index: {}]
  %s4 = inlined_call_operand.vmem [shape: f32[1,32], index: 4, kind: input, shape index: {}]
  %s5 = inlined_call_operand.hbm [shape: f32[32,64], index: 5, kind: input, shape index: {}]
  %s6 = inlined_call_operand.vmem [shape: f32[1,64], index: 6, kind: input, shape index: {}]
  %s7 = inlined_call_operand.hbm [shape: f32[64,128], index: 7, kind: input, shape index: {}]
  %s8 = inlined_call_operand.vmem [shape: f32[1,128], index: 8, kind: input, shape index: {}]
  %s9 = inlined_call_operand.hbm [shape: f32[2,128], index: 9, kind: output, shape index: {}]
  %s10 = sld [smem:[#allocation0]]
  $region66: #{tpu_custom_call.1} parent=0
    _
  %s12 = ssub.s32 1, %s10
  %s13 = scalar_select 0, %s12, %s10
  $region1: #{tpu_custom_call.1} parent=0
    #allocation2 [shape = 'u8[8192]{0}', space=vmem, size = 0x2000, scoped, tag = 'input window, operand 0, single buffered']
    #allocation3 [shape = 's32[1]{0}', space=sflag, size = 0x4, scoped, tag = 'scoped memory for tpu_custom_call.1']
    #allocation4 [shape = 's32[1]{0}', space=sflag, size = 0x4, scoped, tag = 'scoped memory for tpu_custom_call.1']
    #allocation5 [shape = 'u8[16384]{0}', space=vmem, size = 0x4000, scoped, tag = 'input window, operand 1, single buffered']
    #allocation6 [shape = 's32[1]{0}', space=sflag, size = 0x4, scoped, tag = 'scoped memory for tpu_custom_call.1']
    #allocation7 [shape = 'u8[16384]{0}', space=vmem, size = 0x4000, scoped, tag = 'input window, operand 3, single buffered']
    #allocation8 [shape = 'u8[16384]{0}', space=vmem, size = 0x4000, scoped, tag = 'input window, operand 5, single buffered']
    #allocation9 [shape = 's32[1]{0}', space=sflag, size = 0x4, scoped, tag = 'scoped memory for tpu_custom_call.1']
    #allocation10 [shape = 'u8[32768]{0}', space=vmem, size = 0x8000, scoped, tag = 'input window, operand 7, single buffered']
    #allocation11 [shape = 'u8[1024]{0}', space=vmem, size = 0x400, scoped, tag = 'output window, operand 0, single buffered']
    %14 = vsyncpa [#allocation3], 0
    %15 = vsyncpa [#allocation6], 0
    %16 = vsyncpa [#allocation9], 0
    %17 = vsyncpa [#allocation4], 0
    // Predicated region
    $region2: #{tpu_custom_call.1} parent=1 // pred_check
      _
    $region3: #{tpu_custom_call.1} parent=1 // pred_check_branch
      %19 = sbr.rel (0) target = $region5
    $region4: #{tpu_custom_call.1} parent=1 // pred_region
      %s21 = ssub.s32 256, 256
      %22 = vsyncadd [#allocation3], %s21
      %s23 = sshll.u32 [#allocation2], 4
      %s24 = int_to_ptr.vmem [resolvable:$true] %s23
      %29 = dma.hbm_to_vmem [thread:$0]  %s0, 256, %s24, [#allocation3], 128, 128, 8
    $region5: #{tpu_custom_call.1} parent=1 // pred_fallthru
      _
    // Predicated region
    $region6: #{tpu_custom_call.1} parent=1 // pred_check
      _
    $region7: #{tpu_custom_call.1} parent=1 // pred_check_branch
      %31 = sbr.rel (0) target = $region9
    $region8: #{tpu_custom_call.1} parent=1 // pred_region
      %s33 = ssub.s32 512, 512
      %34 = vsyncadd [#allocation6], %s33
      %s35 = sshll.u32 [#allocation5], 4
      %s36 = int_to_ptr.vmem [resolvable:$true] %s35
      %41 = dma.hbm_to_vmem [thread:$0]  %s1, 512, %s36, [#allocation6], 128, 128, 8
    $region9: #{tpu_custom_call.1} parent=1 // pred_fallthru
      _
    // Predicated region
    $region10: #{tpu_custom_call.1} parent=1 // pred_check
      _
    $region11: #{tpu_custom_call.1} parent=1 // pred_check_branch
      %43 = sbr.rel (0) target = $region13
    $region12: #{tpu_custom_call.1} parent=1 // pred_region
      _
    $region13: #{tpu_custom_call.1} parent=1 // pred_fallthru
      _
    // Predicated region
    $region14: #{tpu_custom_call.1} parent=1 // pred_check
      _
    $region15: #{tpu_custom_call.1} parent=1 // pred_check_branch
      %45 = sbr.rel (0) target = $region17
    $region16: #{tpu_custom_call.1} parent=1 // pred_region
      %s47 = ssub.s32 512, 512
      %48 = vsyncadd [#allocation6], %s47
      %s49 = sshll.u32 [#allocation7], 4
      %s50 = int_to_ptr.vmem [resolvable:$true] %s49
      %55 = dma.hbm_to_vmem [thread:$0]  %s3, 512, %s50, [#allocation6], 128, 128, 8
    $region17: #{tpu_custom_call.1} parent=1 // pred_fallthru
      _
    // Predicated region
    $region18: #{tpu_custom_call.1} parent=1 // pred_check
      _
    $region19: #{tpu_custom_call.1} parent=1 // pred_check_branch
      %57 = sbr.rel (0) target = $region21
    $region20: #{tpu_custom_call.1} parent=1 // pred_region
      _
    $region21: #{tpu_custom_call.1} parent=1 // pred_fallthru
      _
    // Predicated region
    $region22: #{tpu_custom_call.1} parent=1 // pred_check
      _
    $region23: #{tpu_custom_call.1} parent=1 // pred_check_branch
      %59 = sbr.rel (0) target = $region25
    $region24: #{tpu_custom_call.1} parent=1 // pred_region
      %s61 = ssub.s32 512, 512
      %62 = vsyncadd [#allocation9], %s61
      %s63 = sshll.u32 [#allocation8], 4
      %s64 = int_to_ptr.vmem [resolvable:$true] %s63
      %69 = dma.hbm_to_vmem [thread:$0]  %s5, 512, %s64, [#allocation9], 128, 128, 8
    $region25: #{tpu_custom_call.1} parent=1 // pred_fallthru
      _
    // Predicated region
    $region26: #{tpu_custom_call.1} parent=1 // pred_check
      _
    $region27: #{tpu_custom_call.1} parent=1 // pred_check_branch
      %71 = sbr.rel (0) target = $region29
    $region28: #{tpu_custom_call.1} parent=1 // pred_region
      _
    $region29: #{tpu_custom_call.1} parent=1 // pred_fallthru
      _
    // Predicated region
    $region30: #{tpu_custom_call.1} parent=1 // pred_check
      _
    $region31: #{tpu_custom_call.1} parent=1 // pred_check_branch
      %73 = sbr.rel (0) target = $region33
    $region32: #{tpu_custom_call.1} parent=1 // pred_region
      %s75 = ssub.s32 1024, 1024
      %76 = vsyncadd [#allocation9], %s75
      %s77 = sshll.u32 [#allocation10], 4
      %s78 = int_to_ptr.vmem [resolvable:$true] %s77
      %83 = dma.hbm_to_vmem [thread:$0]  %s7, 1024, %s78, [#allocation9], 128, 128, 8
    $region33: #{tpu_custom_call.1} parent=1 // pred_fallthru
      _
    // Predicated region
    $region34: #{tpu_custom_call.1} parent=1 // pred_check
      _
    $region35: #{tpu_custom_call.1} parent=1 // pred_check_branch
      %85 = sbr.rel (0) target = $region37
    $region36: #{tpu_custom_call.1} parent=1 // pred_region
      _
    $region37: #{tpu_custom_call.1} parent=1 // pred_fallthru
      _
    // Predicated region
    $region38: #{tpu_custom_call.1} parent=1 // pred_check
      _
    $region39: #{tpu_custom_call.1} parent=1 // pred_check_branch
      %87 = sbr.rel (0) target = $region41
    $region40: #{tpu_custom_call.1} parent=1 // pred_region
      %88 = dma.done [#allocation3], 256
    $region41: #{tpu_custom_call.1} parent=1 // pred_fallthru
      _
    // Predicated region
    $region42: #{tpu_custom_call.1} parent=1 // pred_check
      _
    $region43: #{tpu_custom_call.1} parent=1 // pred_check_branch
      %90 = sbr.rel (0) target = $region45
    $region44: #{tpu_custom_call.1} parent=1 // pred_region
      %91 = dma.done [#allocation6], 512
    $region45: #{tpu_custom_call.1} parent=1 // pred_fallthru
      _
    // Predicated region
    $region46: #{tpu_custom_call.1} parent=1 // pred_check
      _
    $region47: #{tpu_custom_call.1} parent=1 // pred_check_branch
      %93 = sbr.rel (0) target = $region49
    $region48: #{tpu_custom_call.1} parent=1 // pred_region
      %94 = dma.done [#allocation6], 512
    $region49: #{tpu_custom_call.1} parent=1 // pred_fallthru
      _
    // Predicated region
    $region50: #{tpu_custom_call.1} parent=1 // pred_check
      _
    $region51: #{tpu_custom_call.1} parent=1 // pred_check_branch
      %96 = sbr.rel (0) target = $region53
    $region52: #{tpu_custom_call.1} parent=1 // pred_region
      %97 = dma.done [#allocation9], 512
    $region53: #{tpu_custom_call.1} parent=1 // pred_fallthru
      _
    // Predicated region
    $region54: #{tpu_custom_call.1} parent=1 // pred_check
      _
    $region55: #{tpu_custom_call.1} parent=1 // pred_check_branch
      %99 = sbr.rel (0) target = $region57
    $region56: #{tpu_custom_call.1} parent=1 // pred_region
      %100 = dma.done [#allocation9], 1024
    $region57: #{tpu_custom_call.1} parent=1 // pred_fallthru
      _
    %v101 = vld [vmem:[#allocation2] sm:$0xff]
    %v102 = vld [vmem:[#allocation2 + $0x8] sm:$0xff]
    %v103 = vld [vmem:[#allocation5] sm:$0xff]
    %v104 = vld [vmem:[#allocation5 + $0x8] sm:$0xff]
    %v105 = vld [vmem:[#allocation5 + $0x10] sm:$0xff]
    %v106 = vld [vmem:[#allocation5 + $0x18] sm:$0xff]
    %v107 = vld [vmem:[%s2] sm:$0x1]
    %v109 = vlaneseq
    %v110 = vshrl.u32 %v109, 7
    %v111 = vsub.s32 0, %v110
    %v112 = vrot.slane %v107, %v111
    %vm114 = vcmask 261120
    %v116 = vsel %vm114, %v101, 0
    %v119 = vsel %vm114, %v102, 0
    %121 = vmatprep.subr.mxu0 0.0
    %122 = vmatpush1.msra.mxu0 %v103
    %123 = vmatprep.subr.mxu0 0.0
    %124 = vmatpush1.msra.mxu0 %v104
    %125 = vmatprep.subr.mxu0 0.0
    %126 = vmatpush1.msra.mxu0 %v105
    %127 = vmatprep.subr.mxu0 0.0
    %128 = vmatpush1.msra.mxu0 %v106
    %129 = vmatprep.subr.mxu0 0.0
    %130 = vmatpush1.msra.mxu0 0.0
    %131 = vmatprep.subr.mxu0 0.0
    %132 = vmatpush1.msra.mxu0 0.0
    %133 = vmatprep.subr.mxu0 0.0
    %134 = vmatpush1.msra.mxu0 0.0
    %135 = vmatprep.subr.mxu0 0.0
    %136 = vmatpush1.msra.mxu0 0.0
    %137 = vmatprep.subr.mxu0 0.0
    %138 = vmatpush1.msra.mxu0 0.0
    %139 = vmatprep.subr.mxu0 0.0
    %140 = vmatpush1.msra.mxu0 0.0
    %141 = vmatprep.subr.mxu0 0.0
    %142 = vmatpush1.msra.mxu0 0.0
    %143 = vmatprep.subr.mxu0 0.0
    %144 = vmatpush1.msra.mxu0 0.0
    %145 = vmatprep.subr.mxu0 0.0
    %146 = vmatpush1.msra.mxu0 0.0
    %147 = vmatprep.subr.mxu0 0.0
    %148 = vmatpush1.msra.mxu0 0.0
    %149 = vmatprep.subr.mxu0 0.0
    %150 = vmatpush1.msra.mxu0 0.0
    %151 = vmatprep.subr.mxu0 0.0
    %152 = vmatpush1.msra.mxu0 0.0
    %153 = vmatprep.subr.mxu0 0.0
    %154 = vmatpush1.msra.mxu0 0.0
    %155 = vmatprep.subr.mxu0 0.0
    %156 = vmatpush1.msra.mxu0 0.0
    %157 = vmatprep.subr.mxu0 0.0
    %158 = vmatpush1.msra.mxu0 0.0
    %159 = vmatprep.subr.mxu0 0.0
    %160 = vmatpush1.msra.mxu0 0.0
    %161 = vmatprep.subr.mxu0 0.0
    %162 = vmatpush1.msra.mxu0 0.0
    %163 = vmatprep.subr.mxu0 0.0
    %164 = vmatpush1.msra.mxu0 0.0
    %165 = vmatprep.subr.mxu0 0.0
    %166 = vmatpush1.msra.mxu0 0.0
    %167 = vmatprep.subr.mxu0 0.0
    %168 = vmatpush1.msra.mxu0 0.0
    %169 = vmatprep.subr.mxu0 0.0
    %170 = vmatpush1.msra.mxu0 0.0
    %171 = vmatprep.subr.mxu0 0.0
    %172 = vmatpush1.msra.mxu0 0.0
    %173 = vmatprep.subr.mxu0 0.0
    %174 = vmatpush1.msra.mxu0 0.0
    %175 = vmatprep.subr.mxu0 0.0
    %176 = vmatpush1.msra.mxu0 0.0
    %177 = vmatprep.subr.mxu0 0.0
    %178 = vmatpush1.msra.mxu0 0.0
    %179 = vmatprep.subr.mxu0 0.0
    %180 = vmatpush1.msra.mxu0 0.0
    %181 = vmatprep.subr.mxu0 0.0
    %182 = vmatpush1.msra.mxu0 0.0
    %183 = vmatprep.subr.mxu0 0.0
    %184 = vmatpush1.msra.mxu0 0.0
    %185 = vmatprep.mubr.f32.mxu0 0.0
    %186 = vmatmul.mubr.f32.gmra.mrb[0].mxu0 %v116
    %v187 = vpop.f32.mrb[0].mxu0
    %v188 = vadd.f32 %v112, %v187
    %v189 = vpop.f32.mrb[0].mxu0
    %190 = vmatprep.mubr.f32.mxu0 0.0
    %191 = vmatmul.mubr.f32.gmra.mrb[0].mxu0 %v119
    %v192 = vpop.f32.mrb[0].mxu0
    %v193 = vadd.f32 %v112, %v192
    %v194 = vpop.f32.mrb[0].mxu0
    %195 = vdwg.mxu0
    %v196 = vlaneseq
    %v197 = vshrl.u32 %v196, 7
    %v198 = vsub.s32 7, %v197
    %v199 = vrot.slane %v188, %v198
    %v200 = vlaneseq
    %v201 = vshrl.u32 %v200, 7
    %v202 = vsub.s32 7, %v201
    %v203 = vrot.slane %v193, %v202
    %206 = vrot.lane.b32.xlu0 %v188, 64
    %v207 = vpop.permute.xlu0 %206
    %208 = vrot.lane.b32.xlu0 %v193, 64
    %v209 = vpop.permute.xlu0 %208
    %v212 = vmul.f32 %v199, %v207
    %v213 = vmul.f32 %v203, %v209
    %216 = vrot.lane.b32.xlu0 %v212, 64
    %v217 = vpop.permute.xlu0 %216
    %218 = vrot.lane.b32.xlu0 %v213, 64
    %v219 = vpop.permute.xlu0 %218
    %v222 = vsel %vm114, %v217, 0.0
    %223 = vadd.xlane.f32.xlu0 %v222
    %v224 = vpop.xlane.xlu0 %223
    %v225 = vsel %vm114, %v219, 0.0
    %226 = vadd.xlane.f32.xlu0 %v225
    %v227 = vpop.xlane.xlu0 %226
    %v230 = vlaneseq
    %v231 = vand.u32 %v230, 127
    %v232 = vlaneseq
    %v233 = vshrl.u32 %v232, 7
    %v234 = vsub.s32 %v231, %v233
    %v235 = vrot.slane %v224, %v234
    %v236 = vlaneseq
    %v237 = vshrl.u32 %v236, 7
    %v238 = vsub.s32 %v231, %v237
    %v239 = vrot.slane %v227, %v238
    %vm240 = vcmask 1041409
    %v241 = vsel %vm240, %v239, %v235
    %vm243 = vcmask 58368
    %v244 = vsel %vm243, %v241, -inf
    %245 = vmax.xlane.f32.xlu0 %v244
    %v246 = vpop.xlane.xlu0 %245
    %v248 = vlaneseq
    %v249 = vshrl.u32 %v248, 7
    %v250 = vsub.s32 0, %v249
    %v251 = vrot.slane %v246, %v250
    %v252 = vlaneseq
    %v253 = vshrl.u32 %v252, 7
    %v254 = vsub.s32 1, %v253
    %v255 = vrot.slane %v246, %v254
    %v258 = vsub.f32 %v224, %v251
    %v259 = vsub.f32 %v227, %v255
    %v260 = vmul.f32 %v258, 1.442695
    %v261 = vpow.pop %v260
    %v262 = vmul.f32 %v259, 1.442695
    %v263 = vpow.pop %v262
    %266 = vset.pattern.permute.xlu0 0
    %267 = vperm.xlu0 %266, %v261
    %v268 = vpop.permute.xlu0 %267
    %269 = vset.pattern.permute.xlu0 0
    %270 = vperm.xlu0 %269, %v263
    %v271 = vpop.permute.xlu0 %270
    %v272 = vlaneseq
    %v273 = vshrl.u32 %v272, 7
    %v274 = vsub.s32 %v231, %v273
    %v275 = vrot.slane %v268, %v274
    %v276 = vlaneseq
    %v277 = vshrl.u32 %v276, 7
    %v278 = vsub.s32 %v231, %v277
    %v279 = vrot.slane %v271, %v278
    %v280 = vsel %vm240, %v279, %v275
    %v282 = vsel %vm243, %v280, 0.0
    %283 = vadd.xlane.f32.xlu0 %v282
    %v284 = vpop.xlane.xlu0 %283
    %v285 = vrcp.pop %v284
    %v287 = vlaneseq
    %v288 = vshrl.u32 %v287, 7
    %v289 = vsub.s32 0, %v288
    %v290 = vrot.slane %v285, %v289
    %v291 = vlaneseq
    %v292 = vshrl.u32 %v291, 7
    %v293 = vsub.s32 1, %v292
    %v294 = vrot.slane %v285, %v293
    %v297 = vmul.f32 %v261, %v290
    %v298 = vmul.f32 %v263, %v294
    %300 = vset.pattern.permute.xlu0 0
    %301 = vperm.xlu0 %300, %v297
    %v302 = vpop.permute.xlu0 %301
    %305 = vset.pattern.permute.xlu0 0
    %306 = vperm.xlu0 %305, %v298
    %v307 = vpop.permute.xlu0 %306
    %v309 = vmul.f32 %v302, %v188
    %v310 = vmul.f32 %v307, %v193
    %vm311 = vcmask 785408
    %v312 = vsel %vm311, %v309, 0.0
    %v313 = vrot.slane %v312, 4
    %v314 = vadd.f32 %v312, %v313
    %v315 = vrot.slane %v314, 2
    %v316 = vadd.f32 %v314, %v315
    %v317 = vrot.slane %v316, 1
    %v318 = vadd.f32 %v316, %v317
    %v319 = vsel %vm311, %v310, 0.0
    %v320 = vrot.slane %v319, 4
    %v321 = vadd.f32 %v319, %v320
    %v322 = vrot.slane %v321, 2
    %v323 = vadd.f32 %v321, %v322
    %v324 = vrot.slane %v323, 1
    %v325 = vadd.f32 %v323, %v324
    %v326 = vld [vmem:[#allocation7] sm:$0xff]
    %v327 = vld [vmem:[#allocation7 + $0x8] sm:$0xff]
    %v328 = vld [vmem:[#allocation7 + $0x10] sm:$0xff]
    %v329 = vld [vmem:[#allocation7 + $0x18] sm:$0xff]
    %v330 = vld [vmem:[%s4] sm:$0x1]
    %v332 = vlaneseq
    %v333 = vshrl.u32 %v332, 7
    %v334 = vsub.s32 0, %v333
    %v335 = vrot.slane %v330, %v334
    %v339 = vsel %vm240, %v325, %v318
    %340 = vrot.lane.b32.xlu0 %v339, 96
    %v341 = vpop.permute.xlu0 %340
    %v342 = vsel %vm114, %v341, 0
    %344 = vmatprep.subr.mxu0 0.0
    %345 = vmatpush1.msra.mxu0 %v326
    %346 = vmatprep.subr.mxu0 0.0
    %347 = vmatpush1.msra.mxu0 %v327
    %348 = vmatprep.subr.mxu0 0.0
    %349 = vmatpush1.msra.mxu0 %v328
    %350 = vmatprep.subr.mxu0 0.0
    %351 = vmatpush1.msra.mxu0 %v329
    %352 = vmatprep.subr.mxu0 0.0
    %353 = vmatpush1.msra.mxu0 0.0
    %354 = vmatprep.subr.mxu0 0.0
    %355 = vmatpush1.msra.mxu0 0.0
    %356 = vmatprep.subr.mxu0 0.0
    %357 = vmatpush1.msra.mxu0 0.0
    %358 = vmatprep.subr.mxu0 0.0
    %359 = vmatpush1.msra.mxu0 0.0
    %360 = vmatprep.subr.mxu0 0.0
    %361 = vmatpush1.msra.mxu0 0.0
    %362 = vmatprep.subr.mxu0 0.0
    %363 = vmatpush1.msra.mxu0 0.0
    %364 = vmatprep.subr.mxu0 0.0
    %365 = vmatpush1.msra.mxu0 0.0
    %366 = vmatprep.subr.mxu0 0.0
    %367 = vmatpush1.msra.mxu0 0.0
    %368 = vmatprep.subr.mxu0 0.0
    %369 = vmatpush1.msra.mxu0 0.0
    %370 = vmatprep.subr.mxu0 0.0
    %371 = vmatpush1.msra.mxu0 0.0
    %372 = vmatprep.subr.mxu0 0.0
    %373 = vmatpush1.msra.mxu0 0.0
    %374 = vmatprep.subr.mxu0 0.0
    %375 = vmatpush1.msra.mxu0 0.0
    %376 = vmatprep.subr.mxu0 0.0
    %377 = vmatpush1.msra.mxu0 0.0
    %378 = vmatprep.subr.mxu0 0.0
    %379 = vmatpush1.msra.mxu0 0.0
    %380 = vmatprep.subr.mxu0 0.0
    %381 = vmatpush1.msra.mxu0 0.0
    %382 = vmatprep.subr.mxu0 0.0
    %383 = vmatpush1.msra.mxu0 0.0
    %384 = vmatprep.subr.mxu0 0.0
    %385 = vmatpush1.msra.mxu0 0.0
    %386 = vmatprep.subr.mxu0 0.0
    %387 = vmatpush1.msra.mxu0 0.0
    %388 = vmatprep.subr.mxu0 0.0
    %389 = vmatpush1.msra.mxu0 0.0
    %390 = vmatprep.subr.mxu0 0.0
    %391 = vmatpush1.msra.mxu0 0.0
    %392 = vmatprep.subr.mxu0 0.0
    %393 = vmatpush1.msra.mxu0 0.0
    %394 = vmatprep.subr.mxu0 0.0
    %395 = vmatpush1.msra.mxu0 0.0
    %396 = vmatprep.subr.mxu0 0.0
    %397 = vmatpush1.msra.mxu0 0.0
    %398 = vmatprep.subr.mxu0 0.0
    %399 = vmatpush1.msra.mxu0 0.0
    %400 = vmatprep.subr.mxu0 0.0
    %401 = vmatpush1.msra.mxu0 0.0
    %402 = vmatprep.subr.mxu0 0.0
    %403 = vmatpush1.msra.mxu0 0.0
    %404 = vmatprep.subr.mxu0 0.0
    %405 = vmatpush1.msra.mxu0 0.0
    %406 = vmatprep.subr.mxu0 0.0
    %407 = vmatpush1.msra.mxu0 0.0
    %408 = vmatprep.mubr.f32.mxu0 0.0
    %409 = vmatmul.mubr.f32.gmra.mrb[0].mxu0 %v342
    %v410 = vpop.f32.mrb[0].mxu0
    %v411 = vadd.f32 %v335, %v410
    %v412 = vpop.f32.mrb[0].mxu0
    %413 = vdwg.mxu0
    %v414 = vmax.f32 %v411, 0.0
    %v415 = vld [vmem:[#allocation8] sm:$0xff]
    %v416 = vld [vmem:[#allocation8 + $0x8] sm:$0xff]
    %v417 = vld [vmem:[#allocation8 + $0x10] sm:$0xff]
    %v418 = vld [vmem:[#allocation8 + $0x18] sm:$0xff]
    %v419 = vld [vmem:[%s6] sm:$0x1]
    %v421 = vlaneseq
    %v422 = vshrl.u32 %v421, 7
    %v423 = vsub.s32 0, %v422
    %v424 = vrot.slane %v419, %v423
    %v427 = vsel %vm114, %v414, 0
    %429 = vmatprep.subr.mxu0 0.0
    %430 = vmatpush1.msra.mxu0 %v415
    %431 = vmatprep.subr.mxu0 0.0
    %432 = vmatpush1.msra.mxu0 %v416
    %433 = vmatprep.subr.mxu0 0.0
    %434 = vmatpush1.msra.mxu0 %v417
    %435 = vmatprep.subr.mxu0 0.0
    %436 = vmatpush1.msra.mxu0 %v418
    %437 = vmatprep.subr.mxu0 0.0
    %438 = vmatpush1.msra.mxu0 0.0
    %439 = vmatprep.subr.mxu0 0.0
    %440 = vmatpush1.msra.mxu0 0.0
    %441 = vmatprep.subr.mxu0 0.0
    %442 = vmatpush1.msra.mxu0 0.0
    %443 = vmatprep.subr.mxu0 0.0
    %444 = vmatpush1.msra.mxu0 0.0
    %445 = vmatprep.subr.mxu0 0.0
    %446 = vmatpush1.msra.mxu0 0.0
    %447 = vmatprep.subr.mxu0 0.0
    %448 = vmatpush1.msra.mxu0 0.0
    %449 = vmatprep.subr.mxu0 0.0
    %450 = vmatpush1.msra.mxu0 0.0
    %451 = vmatprep.subr.mxu0 0.0
    %452 = vmatpush1.msra.mxu0 0.0
    %453 = vmatprep.subr.mxu0 0.0
    %454 = vmatpush1.msra.mxu0 0.0
    %455 = vmatprep.subr.mxu0 0.0
    %456 = vmatpush1.msra.mxu0 0.0
    %457 = vmatprep.subr.mxu0 0.0
    %458 = vmatpush1.msra.mxu0 0.0
    %459 = vmatprep.subr.mxu0 0.0
    %460 = vmatpush1.msra.mxu0 0.0
    %461 = vmatprep.subr.mxu0 0.0
    %462 = vmatpush1.msra.mxu0 0.0
    %463 = vmatprep.subr.mxu0 0.0
    %464 = vmatpush1.msra.mxu0 0.0
    %465 = vmatprep.subr.mxu0 0.0
    %466 = vmatpush1.msra.mxu0 0.0
    %467 = vmatprep.subr.mxu0 0.0
    %468 = vmatpush1.msra.mxu0 0.0
    %469 = vmatprep.subr.mxu0 0.0
    %470 = vmatpush1.msra.mxu0 0.0
    %471 = vmatprep.subr.mxu0 0.0
    %472 = vmatpush1.msra.mxu0 0.0
    %473 = vmatprep.subr.mxu0 0.0
    %474 = vmatpush1.msra.mxu0 0.0
    %475 = vmatprep.subr.mxu0 0.0
    %476 = vmatpush1.msra.mxu0 0.0
    %477 = vmatprep.subr.mxu0 0.0
    %478 = vmatpush1.msra.mxu0 0.0
    %479 = vmatprep.subr.mxu0 0.0
    %480 = vmatpush1.msra.mxu0 0.0
    %481 = vmatprep.subr.mxu0 0.0
    %482 = vmatpush1.msra.mxu0 0.0
    %483 = vmatprep.subr.mxu0 0.0
    %484 = vmatpush1.msra.mxu0 0.0
    %485 = vmatprep.subr.mxu0 0.0
    %486 = vmatpush1.msra.mxu0 0.0
    %487 = vmatprep.subr.mxu0 0.0
    %488 = vmatpush1.msra.mxu0 0.0
    %489 = vmatprep.subr.mxu0 0.0
    %490 = vmatpush1.msra.mxu0 0.0
    %491 = vmatprep.subr.mxu0 0.0
    %492 = vmatpush1.msra.mxu0 0.0
    %493 = vmatprep.mubr.f32.mxu0 0.0
    %494 = vmatmul.mubr.f32.gmra.mrb[0].mxu0 %v427
    %v495 = vpop.f32.mrb[0].mxu0
    %v496 = vadd.f32 %v424, %v495
    %v497 = vpop.f32.mrb[0].mxu0
    %498 = vdwg.mxu0
    %v499 = vmax.f32 %v496, 0.0
    %v500 = vld [vmem:[#allocation10] sm:$0xff]
    %v501 = vld [vmem:[#allocation10 + $0x8] sm:$0xff]
    %v502 = vld [vmem:[#allocation10 + $0x10] sm:$0xff]
    %v503 = vld [vmem:[#allocation10 + $0x18] sm:$0xff]
    %v504 = vld [vmem:[#allocation10 + $0x20] sm:$0xff]
    %v505 = vld [vmem:[#allocation10 + $0x28] sm:$0xff]
    %v506 = vld [vmem:[#allocation10 + $0x30] sm:$0xff]
    %v507 = vld [vmem:[#allocation10 + $0x38] sm:$0xff]
    %v508 = vld [vmem:[%s8] sm:$0x1]
    %v510 = vlaneseq
    %v511 = vshrl.u32 %v510, 7
    %v512 = vsub.s32 0, %v511
    %v513 = vrot.slane %v508, %v512
    %vm515 = vcmask 523264
    %v517 = vsel %vm515, %v499, 0
    %519 = vmatprep.subr.mxu0 0.0
    %520 = vmatpush1.msra.mxu0 %v500
    %521 = vmatprep.subr.mxu0 0.0
    %522 = vmatpush1.msra.mxu0 %v501
    %523 = vmatprep.subr.mxu0 0.0
    %524 = vmatpush1.msra.mxu0 %v502
    %525 = vmatprep.subr.mxu0 0.0
    %526 = vmatpush1.msra.mxu0 %v503
    %527 = vmatprep.subr.mxu0 0.0
    %528 = vmatpush1.msra.mxu0 %v504
    %529 = vmatprep.subr.mxu0 0.0
    %530 = vmatpush1.msra.mxu0 %v505
    %531 = vmatprep.subr.mxu0 0.0
    %532 = vmatpush1.msra.mxu0 %v506
    %533 = vmatprep.subr.mxu0 0.0
    %534 = vmatpush1.msra.mxu0 %v507
    %535 = vmatprep.subr.mxu0 0.0
    %536 = vmatpush1.msra.mxu0 0.0
    %537 = vmatprep.subr.mxu0 0.0
    %538 = vmatpush1.msra.mxu0 0.0
    %539 = vmatprep.subr.mxu0 0.0
    %540 = vmatpush1.msra.mxu0 0.0
    %541 = vmatprep.subr.mxu0 0.0
    %542 = vmatpush1.msra.mxu0 0.0
    %543 = vmatprep.subr.mxu0 0.0
    %544 = vmatpush1.msra.mxu0 0.0
    %545 = vmatprep.subr.mxu0 0.0
    %546 = vmatpush1.msra.mxu0 0.0
    %547 = vmatprep.subr.mxu0 0.0
    %548 = vmatpush1.msra.mxu0 0.0
    %549 = vmatprep.subr.mxu0 0.0
    %550 = vmatpush1.msra.mxu0 0.0
    %551 = vmatprep.subr.mxu0 0.0
    %552 = vmatpush1.msra.mxu0 0.0
    %553 = vmatprep.subr.mxu0 0.0
    %554 = vmatpush1.msra.mxu0 0.0
    %555 = vmatprep.subr.mxu0 0.0
    %556 = vmatpush1.msra.mxu0 0.0
    %557 = vmatprep.subr.mxu0 0.0
    %558 = vmatpush1.msra.mxu0 0.0
    %559 = vmatprep.subr.mxu0 0.0
    %560 = vmatpush1.msra.mxu0 0.0
    %561 = vmatprep.subr.mxu0 0.0
    %562 = vmatpush1.msra.mxu0 0.0
    %563 = vmatprep.subr.mxu0 0.0
    %564 = vmatpush1.msra.mxu0 0.0
    %565 = vmatprep.subr.mxu0 0.0
    %566 = vmatpush1.msra.mxu0 0.0
    %567 = vmatprep.subr.mxu0 0.0
    %568 = vmatpush1.msra.mxu0 0.0
    %569 = vmatprep.subr.mxu0 0.0
    %570 = vmatpush1.msra.mxu0 0.0
    %571 = vmatprep.subr.mxu0 0.0
    %572 = vmatpush1.msra.mxu0 0.0
    %573 = vmatprep.subr.mxu0 0.0
    %574 = vmatpush1.msra.mxu0 0.0
    %575 = vmatprep.subr.mxu0 0.0
    %576 = vmatpush1.msra.mxu0 0.0
    %577 = vmatprep.subr.mxu0 0.0
    %578 = vmatpush1.msra.mxu0 0.0
    %579 = vmatprep.subr.mxu0 0.0
    %580 = vmatpush1.msra.mxu0 0.0
    %581 = vmatprep.subr.mxu0 0.0
    %582 = vmatpush1.msra.mxu0 0.0
    %583 = vmatprep.mubr.f32.mxu0 0.0
    %584 = vmatmul.mubr.f32.gmra.mrb[0].mxu0 %v517
    %v585 = vpop.f32.mrb[0].mxu0
    %v586 = vadd.f32 %v513, %v585
    %v587 = vpop.f32.mrb[0].mxu0
    %588 = vdwg.mxu0
    %v589 = vtanh.pop %v586
    %v590 = vmul.f32 %v589, 2.0
    %591 = vst [vmem:[#allocation11] sm:$0x3] %v590
    // Predicated region
    $region58: #{tpu_custom_call.1} parent=1 // pred_check
      _
    $region59: #{tpu_custom_call.1} parent=1 // pred_check_branch
      %593 = sbr.rel (0) target = $region61
    $region60: #{tpu_custom_call.1} parent=1 // pred_region
      %s595 = ssub.s32 32, 32
      %596 = vsyncadd [#allocation4], %s595
      %s598 = sshll.u32 [#allocation11], 4
      %s599 = int_to_ptr.vmem [resolvable:$true] %s598
      %601 = dma.vmem_to_hbm [thread:$0]  %s599, 32, %s9, [#allocation4]
    $region61: #{tpu_custom_call.1} parent=1 // pred_fallthru
      _
    // Predicated region
    $region62: #{tpu_custom_call.1} parent=1 // pred_check
      _
    $region63: #{tpu_custom_call.1} parent=1 // pred_check_branch
      %603 = sbr.rel (0) target = $region65
    $region64: #{tpu_custom_call.1} parent=1 // pred_region
      %604 = dma.done [#allocation4], 32
    $region65: #{tpu_custom_call.1} parent=1 // pred_fallthru
      _
    %605 = vsyncpa [#allocation3], 1
    %606 = vsyncpa [#allocation6], 1
    %607 = vsyncpa [#allocation9], 1
    %608 = vsyncpa [#allocation4], 1

</llo_original>
